<compile_context>
chip_gen: v7x
topology: tpu7x:2x2x1
jax: 0.10.0
libtpu: 0.0.40
codegen_flags: <defaults>
</compile_context>

<pallas_src>
import numpy as np
import jax
import jax.numpy as jnp
from jax.experimental import pallas as pl
from jax.experimental.pallas import tpu as pltpu

# ---- problem sizes (small, consistent with the module) ----
B = 8          # batch
S = 16         # obs_space[state_key].shape[-1]
GSIZE = 8      # obs_space[goal_key].shape[-1]
H = 32         # G.hidden_size
A = 4          # act_dim
SIZE = 2 * S   # MLP input size
LANES = 128    # lane-dense output width / padded last-layer width

_LOG_2PI = float(np.log(2.0 * np.pi))


def _round_up(x, m):
    return (x + m - 1) // m * m


# Row layout of the main packed weight slab (width H):
R_W1S = 0                    # W1 rows multiplying the state         (S     x H)
R_W1G = R_W1S + S            # effective goal rows: Wg @ W1[S:]      (GSIZE x H)
R_W2 = R_W1G + GSIZE         # W2                                    (H     x H)
R_W3 = R_W2 + H              # W3                                    (H     x H)
R_B1 = R_W3 + H              # effective bias: b1 + bg @ W1[S:]      (1     x H)
R_B2 = R_B1 + 1              # b2                                    (1     x H)
R_B3 = R_B2 + 1              # b3                                    (1     x H)
W_ROWS = _round_up(R_B3 + 1, 8)

# Row layout of the last-layer slab (width LANES, zero-padded beyond A):
R_W4 = 0                     # W4 zero-padded to 128 lanes           (H x LANES)
R_B4 = H                     # b4 zero-padded to 128 lanes           (1 x LANES)
W4_ROWS = _round_up(R_B4 + 1, 8)


def actor_kernel(state_ref, goal_ref, w_ref, w4_ref, mu_ref):
    # Static slices into the packed parameter slabs.
    w1s = w_ref[R_W1S:R_W1S + S, :]
    w1g = w_ref[R_W1G:R_W1G + GSIZE, :]
    w2 = w_ref[R_W2:R_W2 + H, :]
    w3 = w_ref[R_W3:R_W3 + H, :]
    b1 = w_ref[R_B1:R_B1 + 1, :]
    b2 = w_ref[R_B2:R_B2 + 1, :]
    b3 = w_ref[R_B3:R_B3 + 1, :]
    w4 = w4_ref[R_W4:R_W4 + H, :]
    b4 = w4_ref[R_B4:R_B4 + 1, :]

    # Layer 1 with goal_preproc + concat folded in.
    h = (jnp.dot(state_ref[...], w1s, preferred_element_type=jnp.float32)
         + jnp.dot(goal_ref[...], w1g, preferred_element_type=jnp.float32)
         + b1)
    h = jnp.maximum(h, 0.0)
    h = jnp.maximum(jnp.dot(h, w2, preferred_element_type=jnp.float32) + b2, 0.0)
    h = jnp.maximum(jnp.dot(h, w3, preferred_element_type=jnp.float32) + b3, 0.0)
    # Last layer: lane-dense (TB, 128) store; only cols [0, A) are meaningful.
    mu_ref[...] = jnp.dot(h, w4, preferred_element_type=jnp.float32) + b4


def pack_params(params):
    """Fold goal_preproc into layer 1 and pack everything into two slabs."""
    w1 = params["w1"]                               # (2S, H)
    w1_state = w1[:S, :]                            # (S, H)
    w1_goal = w1[S:, :]                             # (S, H)
    w1g_eff = params["wg"] @ w1_goal                # (GSIZE, H)
    b1_eff = params["b1"] + params["bg"] @ w1_goal  # (1, H)

    wslab = jnp.concatenate([
        w1_state, w1g_eff, params["w2"], params["w3"],
        b1_eff, params["b2"], params["b3"],
        jnp.zeros((W_ROWS - (R_B3 + 1), H), jnp.float32),
    ], axis=0)                                      # (W_ROWS, H)

    w4_pad = jnp.zeros((H, LANES), jnp.float32).at[:, :A].set(params["w4"])
    b4_pad = jnp.zeros((1, LANES), jnp.float32).at[:, :A].set(params["b4"])
    w4slab = jnp.concatenate([
        w4_pad, b4_pad,
        jnp.zeros((W4_ROWS - (R_B4 + 1), LANES), jnp.float32),
    ], axis=0)                                      # (W4_ROWS, LANES)
    return wslab, w4slab


def actor_forward(params, state, goal, act):
    """Returns (mu, std, logp_a) matching Actor.forward(obs, act)."""
    batch = state.shape[0]
    tb = min(batch, 256)                     # batch tile (multiple of 8)
    assert batch % tb == 0 and tb % 8 == 0

    wslab, w4slab = pack_params(params)

    flops = 2 * batch * (S * H + GSIZE * H + 2 * H * H + H * LANES)
    bytes_accessed = 4 * (batch * (S + GSIZE + LANES)
                          + int(wslab.size) + int(w4slab.size))

    mu_pad = pl.pallas_call(
        actor_kernel,
        out_shape=jax.ShapeDtypeStruct((batch, LANES), jnp.float32),
        grid=(batch // tb,),
        in_specs=[
            pl.BlockSpec((tb, S), lambda i: (i, 0)),
            pl.BlockSpec((tb, GSIZE), lambda i: (i, 0)),
            pl.BlockSpec((W_ROWS, H), lambda i: (0, 0)),       # weights resident
            pl.BlockSpec((W4_ROWS, LANES), lambda i: (0, 0)),  # weights resident
        ],
        out_specs=pl.BlockSpec((tb, LANES), lambda i: (i, 0)),
        compiler_params=pltpu.CompilerParams(dimension_semantics=("parallel",)),
        cost_estimate=pl.CostEstimate(flops=flops, transcendentals=0,
                                      bytes_accessed=bytes_accessed),
    )(state, goal, wslab, w4slab)

    mu = mu_pad[:, :A]
    log_std = params["log_std"][0]           # (A,)
    std = jnp.exp(log_std)
    # Normal(mu, std).log_prob(act).sum(-1) — tiny elementwise op, fuses in XLA.
    d = act - mu
    elem_logp = -0.5 * d * d * jnp.exp(-2.0 * log_std) - log_std - 0.5 * _LOG_2PI
    logp_a = jnp.sum(elem_logp, axis=-1)
    return mu, std, logp_a


def init_params(key):
    """Deterministic synthetic parameters (shapes from Actor.__init__)."""
    ks = jax.random.split(key, 10)

    def lin(kw, kb, fan_in, fan_out):
        bound = 1.0 / np.sqrt(fan_in)
        w = jax.random.uniform(kw, (fan_in, fan_out), jnp.float32, -bound, bound)
        b = jax.random.uniform(kb, (1, fan_out), jnp.float32, -bound, bound)
        return w, b

    wg, bg = lin(ks[0], ks[1], GSIZE, S)      # goal_preproc: Linear(gsize, size//2)
    w1, b1 = lin(ks[2], ks[3], SIZE, H)
    w2, b2 = lin(ks[4], ks[5], H, H)
    w3, b3 = lin(ks[6], ks[7], H, H)
    w4, b4 = lin(ks[8], ks[9], H, A)
    log_std = jnp.full((1, A), -0.5, dtype=jnp.float32)
    return dict(wg=wg, bg=bg, w1=w1, b1=b1, w2=w2, b2=b2,
                w3=w3, b3=b3, w4=w4, b4=b4, log_std=log_std)


def _reference(params, state, goal, act):
    """Pure-JAX reference mirroring the PyTorch module exactly."""
    g = goal @ params["wg"] + params["bg"]
    x = jnp.concatenate([state, g], axis=-1)
    h = jax.nn.relu(x @ params["w1"] + params["b1"])
    h = jax.nn.relu(h @ params["w2"] + params["b2"])
    h = jax.nn.relu(h @ params["w3"] + params["b3"])
    mu = h @ params["w4"] + params["b4"]
    log_std = params["log_std"]
    std = jnp.exp(log_std)
    elem = -((act - mu) ** 2) / (2.0 * std ** 2) - log_std - 0.5 * _LOG_2PI
    return mu, jnp.exp(log_std[0]), jnp.sum(elem, axis=-1)


if __name__ == "__main__":
    key = jax.random.PRNGKey(0)
    kp, ks, kg, ka = jax.random.split(key, 4)

    params = init_params(kp)
    state = jax.random.normal(ks, (B, S), jnp.float32)     # obs[G.state_key]
    goal = jax.random.normal(kg, (B, GSIZE), jnp.float32)  # obs[goal_key]
    act = jax.random.normal(ka, (B, A), jnp.float32)

    mu, std, logp = jax.jit(actor_forward)(params, state, goal, act)
    jax.block_until_ready((mu, std, logp))

    mu_r, std_r, logp_r = _reference(params, state, goal, act)
    assert np.allclose(np.asarray(mu), np.asarray(mu_r), atol=1e-4), "mu mismatch"
    assert np.allclose(np.asarray(std), np.asarray(std_r), atol=1e-6), "std mismatch"
    assert np.allclose(np.asarray(logp), np.asarray(logp_r), atol=1e-3), "logp mismatch"

    print("KERNEL_OK")
</pallas_src>

<mosaic_0001>
module attributes {stable_mosaic.version = 11 : i64} {
  func.func @actor_kernel(%arg0: i32, %arg1: memref<8x16xf32, #tpu.memory_space<vmem>>, %arg2: memref<8x8xf32, #tpu.memory_space<vmem>>, %arg3: memref<96x32xf32, #tpu.memory_space<vmem>>, %arg4: memref<40x128xf32, #tpu.memory_space<vmem>>, %arg5: memref<8x128xf32, #tpu.memory_space<vmem>>) attributes {dimension_semantics = [#tpu.dimension_semantics<parallel>], iteration_bounds = array<i64: 1>, scalar_prefetch = 0 : i64, scratch_operands = 0 : i64, tpu.core_type = #tpu.core_type<tc>, window_params = [{transform_indices = @transform_0, window_bounds = array<i64: 8, 16>}, {transform_indices = @transform_1, window_bounds = array<i64: 8, 8>}, {pipeline_mode = #tpu.pipeline_mode<synchronous>, transform_indices = @transform_2, window_bounds = array<i64: 96, 32>}, {pipeline_mode = #tpu.pipeline_mode<synchronous>, transform_indices = @transform_3, window_bounds = array<i64: 40, 128>}, {transform_indices = @transform_4, window_bounds = array<i64: 8, 128>}]} {
    %c0 = arith.constant 0 : index
    %c0_0 = arith.constant 0 : index
    %0 = vector.load %arg3[%c0, %c0_0] : memref<96x32xf32, #tpu.memory_space<vmem>>, vector<16x32xf32>
    %c16 = arith.constant 16 : index
    %c0_1 = arith.constant 0 : index
    %1 = vector.load %arg3[%c16, %c0_1] : memref<96x32xf32, #tpu.memory_space<vmem>>, vector<8x32xf32>
    %c24 = arith.constant 24 : index
    %c0_2 = arith.constant 0 : index
    %2 = vector.load %arg3[%c24, %c0_2] : memref<96x32xf32, #tpu.memory_space<vmem>>, vector<32x32xf32>
    %c56 = arith.constant 56 : index
    %c0_3 = arith.constant 0 : index
    %3 = vector.load %arg3[%c56, %c0_3] : memref<96x32xf32, #tpu.memory_space<vmem>>, vector<32x32xf32>
    %c88 = arith.constant 88 : index
    %c0_4 = arith.constant 0 : index
    %4 = vector.load %arg3[%c88, %c0_4] : memref<96x32xf32, #tpu.memory_space<vmem>>, vector<1x32xf32>
    %c89 = arith.constant 89 : index
    %c0_5 = arith.constant 0 : index
    %5 = vector.load %arg3[%c89, %c0_5] : memref<96x32xf32, #tpu.memory_space<vmem>>, vector<1x32xf32>
    %c90 = arith.constant 90 : index
    %c0_6 = arith.constant 0 : index
    %6 = vector.load %arg3[%c90, %c0_6] : memref<96x32xf32, #tpu.memory_space<vmem>>, vector<1x32xf32>
    %c0_7 = arith.constant 0 : index
    %c0_8 = arith.constant 0 : index
    %7 = vector.load %arg4[%c0_7, %c0_8] : memref<40x128xf32, #tpu.memory_space<vmem>>, vector<32x128xf32>
    %c32 = arith.constant 32 : index
    %c0_9 = arith.constant 0 : index
    %8 = vector.load %arg4[%c32, %c0_9] : memref<40x128xf32, #tpu.memory_space<vmem>>, vector<1x128xf32>
    %c0_10 = arith.constant 0 : index
    %c0_11 = arith.constant 0 : index
    %9 = vector.load %arg1[%c0_10, %c0_11] : memref<8x16xf32, #tpu.memory_space<vmem>>, vector<8x16xf32>
    %cst = arith.constant dense<0.000000e+00> : vector<8x32xf32>
    %10 = tpu.matmul %9, %0, %cst {dimension_numbers = #tpu.dot_dimension_numbers<[1], [0], [0], [1], [0, 0, 1, 1], [], []>} : vector<8x16xf32>, vector<16x32xf32>, vector<8x32xf32> -> vector<8x32xf32>
    %c0_12 = arith.constant 0 : index
    %c0_13 = arith.constant 0 : index
    %11 = vector.load %arg2[%c0_12, %c0_13] : memref<8x8xf32, #tpu.memory_space<vmem>>, vector<8x8xf32>
    %cst_14 = arith.constant dense<0.000000e+00> : vector<8x32xf32>
    %12 = tpu.matmul %11, %1, %cst_14 {dimension_numbers = #tpu.dot_dimension_numbers<[1], [0], [0], [1], [0, 0, 1, 1], [], []>} : vector<8x8xf32>, vector<8x32xf32>, vector<8x32xf32> -> vector<8x32xf32>
    %13 = arith.addf %10, %12 : vector<8x32xf32>
    %14 = vector.broadcast %4 : vector<1x32xf32> to vector<8x32xf32>
    %15 = arith.addf %13, %14 : vector<8x32xf32>
    %cst_15 = arith.constant 0.000000e+00 : f32
    %16 = vector.broadcast %cst_15 : f32 to vector<8x32xf32>
    %17 = arith.maximumf %15, %16 : vector<8x32xf32>
    %cst_16 = arith.constant dense<0.000000e+00> : vector<8x32xf32>
    %18 = tpu.matmul %17, %2, %cst_16 {dimension_numbers = #tpu.dot_dimension_numbers<[1], [0], [0], [1], [0, 0, 1, 1], [], []>} : vector<8x32xf32>, vector<32x32xf32>, vector<8x32xf32> -> vector<8x32xf32>
    %19 = vector.broadcast %5 : vector<1x32xf32> to vector<8x32xf32>
    %20 = arith.addf %18, %19 : vector<8x32xf32>
    %cst_17 = arith.constant 0.000000e+00 : f32
    %21 = vector.broadcast %cst_17 : f32 to vector<8x32xf32>
    %22 = arith.maximumf %20, %21 : vector<8x32xf32>
    %cst_18 = arith.constant dense<0.000000e+00> : vector<8x32xf32>
    %23 = tpu.matmul %22, %3, %cst_18 {dimension_numbers = #tpu.dot_dimension_numbers<[1], [0], [0], [1], [0, 0, 1, 1], [], []>} : vector<8x32xf32>, vector<32x32xf32>, vector<8x32xf32> -> vector<8x32xf32>
    %24 = vector.broadcast %6 : vector<1x32xf32> to vector<8x32xf32>
    %25 = arith.addf %23, %24 : vector<8x32xf32>
    %cst_19 = arith.constant 0.000000e+00 : f32
    %26 = vector.broadcast %cst_19 : f32 to vector<8x32xf32>
    %27 = arith.maximumf %25, %26 : vector<8x32xf32>
    %cst_20 = arith.constant dense<0.000000e+00> : vector<8x128xf32>
    %28 = tpu.matmul %27, %7, %cst_20 {dimension_numbers = #tpu.dot_dimension_numbers<[1], [0], [0], [1], [0, 0, 1, 1], [], []>} : vector<8x32xf32>, vector<32x128xf32>, vector<8x128xf32> -> vector<8x128xf32>
    %29 = vector.broadcast %8 : vector<1x128xf32> to vector<8x128xf32>
    %30 = arith.addf %28, %29 : vector<8x128xf32>
    %c0_21 = arith.constant 0 : index
    %c0_22 = arith.constant 0 : index
    %31 = vector.load %arg5[%c0_21, %c0_22] : memref<8x128xf32, #tpu.memory_space<vmem>>, vector<8x128xf32>
    tpu.vector_store %arg5[%c0_21, %c0_22], %30 {strides = array<i32>} : memref<8x128xf32, #tpu.memory_space<vmem>>, vector<8x128xf32>,
    return
  }
  func.func @transform_0(%arg0: i32) -> (i32, i32) {
    %c0_i32 = arith.constant 0 : i32
    %c0_i32_0 = arith.constant 0 : i32
    return %arg0, %c0_i32 : i32, i32
  }
  func.func @transform_1(%arg0: i32) -> (i32, i32) {
    %c0_i32 = arith.constant 0 : i32
    %c0_i32_0 = arith.constant 0 : i32
    return %arg0, %c0_i32 : i32, i32
  }
  func.func @transform_2(%arg0: i32) -> (i32, i32) {
    %c0_i32 = arith.constant 0 : i32
    %c0_i32_0 = arith.constant 0 : i32
    %c0_i32_1 = arith.constant 0 : i32
    return %c0_i32, %c0_i32_0 : i32, i32
  }
  func.func @transform_3(%arg0: i32) -> (i32, i32) {
    %c0_i32 = arith.constant 0 : i32
    %c0_i32_0 = arith.constant 0 : i32
    %c0_i32_1 = arith.constant 0 : i32
    return %c0_i32, %c0_i32_0 : i32, i32
  }
  func.func @transform_4(%arg0: i32) -> (i32, i32) {
    %c0_i32 = arith.constant 0 : i32
    %c0_i32_0 = arith.constant 0 : i32
    return %arg0, %c0_i32 : i32, i32
  }
}

</mosaic_0001>

<llo_original>
// kernel: actor_forward.1
$region0: #{actor_forward.1}
  #allocation0 [shape = 'u32[]', space=smem, size = 0x4, offset = 0x4, fixed_abs, tag = 'smem constant byte address 0x4 - core index']
  #allocation1 [shape = 'u32[144,128]{1,0:T(1,128)}', space=vmem, size = 0x12000, scoped, tag = 'internal scratch']
  %s0 = inlined_call_operand.vmem [shape: f32[8,16], index: 0, kind: input, shape index: {}]
  %s1 = inlined_call_operand.vmem [shape: f32[8,8], index: 1, kind: input, shape index: {}]
  %s2 = inlined_call_operand.vmem [shape: f32[96,32], index: 2, kind: input, shape index: {}]
  %s3 = inlined_call_operand.vmem [shape: f32[40,128], index: 3, kind: input, shape index: {}]
  %s4 = inlined_call_operand.vmem [shape: f32[8,128], index: 4, kind: output, shape index: {}]
  %s5 = sld [smem:[#allocation0]]
  $region26: #{actor_forward.1} parent=0
    _
  %s7 = ssub.s32 1, %s5
  %s8 = scalar_select 0, %s7, %s5
  // Predicated region
  $region2: #{actor_forward.1} parent=0 // pred_check
    _
  $region3: #{actor_forward.1} parent=0 // pred_check_branch
    %10 = sbr.rel (0) target = $region5
  $region4: #{actor_forward.1} parent=0 // pred_region
    _
  $region5: #{actor_forward.1} parent=0 // pred_fallthru
    _
  // Predicated region
  $region6: #{actor_forward.1} parent=0 // pred_check
    _
  $region7: #{actor_forward.1} parent=0 // pred_check_branch
    %12 = sbr.rel (0) target = $region9
  $region8: #{actor_forward.1} parent=0 // pred_region
    _
  $region9: #{actor_forward.1} parent=0 // pred_fallthru
    _
  // Predicated region
  $region10: #{actor_forward.1} parent=0 // pred_check
    _
  $region11: #{actor_forward.1} parent=0 // pred_check_branch
    %14 = sbr.rel (0) target = $region13
  $region12: #{actor_forward.1} parent=0 // pred_region
    _
  $region13: #{actor_forward.1} parent=0 // pred_fallthru
    _
  // Predicated region
  $region14: #{actor_forward.1} parent=0 // pred_check
    _
  $region15: #{actor_forward.1} parent=0 // pred_check_branch
    %16 = sbr.rel (0) target = $region17
  $region16: #{actor_forward.1} parent=0 // pred_region
    _
  $region17: #{actor_forward.1} parent=0 // pred_fallthru
    _
  %v17 = vld [vmem:[%s2] sm:$0xff]
  %v18 = vld [vmem:[%s2 + $0x8] sm:$0xff]
  %v19 = vld [vmem:[%s2 + $0x10] sm:$0xff]
  %v20 = vld [vmem:[%s2 + $0x18] sm:$0xff]
  %v21 = vld [vmem:[%s2 + $0x20] sm:$0xff]
  %v22 = vld [vmem:[%s2 + $0x28] sm:$0xff]
  %v23 = vld [vmem:[%s2 + $0x30] sm:$0xff]
  %v24 = vld [vmem:[%s2 + $0x38] sm:$0xff]
  %v25 = vld [vmem:[%s2 + $0x40] sm:$0xff]
  %v26 = vld [vmem:[%s2 + $0x48] sm:$0xff]
  %v27 = vld [vmem:[%s2 + $0x50] sm:$0xff]
  %v28 = vld [vmem:[%s2 + $0x58] sm:$0x1]
  %v29 = vld [vmem:[%s2 + $0x59] sm:$0x1]
  %v30 = vld [vmem:[%s2 + $0x5a] sm:$0x1]
  %v31 = vld [vmem:[%s3] sm:$0xff]
  %v32 = vld [vmem:[%s3 + $0x8] sm:$0xff]
  %v33 = vld [vmem:[%s3 + $0x10] sm:$0xff]
  %v34 = vld [vmem:[%s3 + $0x18] sm:$0xff]
  %v35 = vld [vmem:[%s3 + $0x20] sm:$0x1]
  %v36 = vld [vmem:[%s0] sm:$0xff]
  %v37 = vld [vmem:[%s1] sm:$0xff]
  %vm38 = vcmask 64512
  %v40 = vsel %vm38, %v37, 0
  %42 = vmatprep.subr.mxu0 0.0
  %43 = vmatpush1.msra.mxu0 %v19
  %44 = vmatprep.subr.mxu0 0.0
  %45 = vmatpush1.msra.mxu0 0.0
  %46 = vmatprep.subr.mxu0 0.0
  %47 = vmatpush1.msra.mxu0 0.0
  %48 = vmatprep.subr.mxu0 0.0
  %49 = vmatpush1.msra.mxu0 0.0
  %50 = vmatprep.subr.mxu0 0.0
  %51 = vmatpush1.msra.mxu0 0.0
  %52 = vmatprep.subr.mxu0 0.0
  %53 = vmatpush1.msra.mxu0 0.0
  %54 = vmatprep.subr.mxu0 0.0
  %55 = vmatpush1.msra.mxu0 0.0
  %56 = vmatprep.subr.mxu0 0.0
  %57 = vmatpush1.msra.mxu0 0.0
  %58 = vmatprep.subr.mxu0 0.0
  %59 = vmatpush1.msra.mxu0 0.0
  %60 = vmatprep.subr.mxu0 0.0
  %61 = vmatpush1.msra.mxu0 0.0
  %62 = vmatprep.subr.mxu0 0.0
  %63 = vmatpush1.msra.mxu0 0.0
  %64 = vmatprep.subr.mxu0 0.0
  %65 = vmatpush1.msra.mxu0 0.0
  %66 = vmatprep.subr.mxu0 0.0
  %67 = vmatpush1.msra.mxu0 0.0
  %68 = vmatprep.subr.mxu0 0.0
  %69 = vmatpush1.msra.mxu0 0.0
  %70 = vmatprep.subr.mxu0 0.0
  %71 = vmatpush1.msra.mxu0 0.0
  %72 = vmatprep.subr.mxu0 0.0
  %73 = vmatpush1.msra.mxu0 0.0
  %74 = vmatprep.subr.mxu0 0.0
  %75 = vmatpush1.msra.mxu0 0.0
  %76 = vmatprep.subr.mxu0 0.0
  %77 = vmatpush1.msra.mxu0 0.0
  %78 = vmatprep.subr.mxu0 0.0
  %79 = vmatpush1.msra.mxu0 0.0
  %80 = vmatprep.subr.mxu0 0.0
  %81 = vmatpush1.msra.mxu0 0.0
  %82 = vmatprep.subr.mxu0 0.0
  %83 = vmatpush1.msra.mxu0 0.0
  %84 = vmatprep.subr.mxu0 0.0
  %85 = vmatpush1.msra.mxu0 0.0
  %86 = vmatprep.subr.mxu0 0.0
  %87 = vmatpush1.msra.mxu0 0.0
  %88 = vmatprep.subr.mxu0 0.0
  %89 = vmatpush1.msra.mxu0 0.0
  %90 = vmatprep.subr.mxu0 0.0
  %91 = vmatpush1.msra.mxu0 0.0
  %92 = vmatprep.subr.mxu0 0.0
  %93 = vmatpush1.msra.mxu0 0.0
  %94 = vmatprep.subr.mxu0 0.0
  %95 = vmatpush1.msra.mxu0 0.0
  %96 = vmatprep.subr.mxu0 0.0
  %97 = vmatpush1.msra.mxu0 0.0
  %98 = vmatprep.subr.mxu0 0.0
  %99 = vmatpush1.msra.mxu0 0.0
  %100 = vmatprep.subr.mxu0 0.0
  %101 = vmatpush1.msra.mxu0 0.0
  %102 = vmatprep.subr.mxu0 0.0
  %103 = vmatpush1.msra.mxu0 0.0
  %104 = vmatprep.subr.mxu0 0.0
  %105 = vmatpush1.msra.mxu0 0.0
  %106 = vmatprep.mubr.f32.mxu0 0.0
  %107 = vmatmul.mubr.f32.gmra.mrb[0].mxu0 %v40
  %v108 = vpop.f32.mrb[0].mxu0
  %v109 = vadd.f32 0.0, %v108
  %v110 = vpop.f32.mrb[0].mxu0
  %111 = vdwg.mxu0
  %vm112 = vcmask 130048
  %v114 = vsel %vm112, %v36, 0
  %116 = vmatprep.subr.mxu0 0.0
  %117 = vmatpush1.msra.mxu0 %v17
  %118 = vmatprep.subr.mxu0 0.0
  %119 = vmatpush1.msra.mxu0 %v18
  %120 = vmatprep.subr.mxu0 0.0
  %121 = vmatpush1.msra.mxu0 0.0
  %122 = vmatprep.subr.mxu0 0.0
  %123 = vmatpush1.msra.mxu0 0.0
  %124 = vmatprep.subr.mxu0 0.0
  %125 = vmatpush1.msra.mxu0 0.0
  %126 = vmatprep.subr.mxu0 0.0
  %127 = vmatpush1.msra.mxu0 0.0
  %128 = vmatprep.subr.mxu0 0.0
  %129 = vmatpush1.msra.mxu0 0.0
  %130 = vmatprep.subr.mxu0 0.0
  %131 = vmatpush1.msra.mxu0 0.0
  %132 = vmatprep.subr.mxu0 0.0
  %133 = vmatpush1.msra.mxu0 0.0
  %134 = vmatprep.subr.mxu0 0.0
  %135 = vmatpush1.msra.mxu0 0.0
  %136 = vmatprep.subr.mxu0 0.0
  %137 = vmatpush1.msra.mxu0 0.0
  %138 = vmatprep.subr.mxu0 0.0
  %139 = vmatpush1.msra.mxu0 0.0
  %140 = vmatprep.subr.mxu0 0.0
  %141 = vmatpush1.msra.mxu0 0.0
  %142 = vmatprep.subr.mxu0 0.0
  %143 = vmatpush1.msra.mxu0 0.0
  %144 = vmatprep.subr.mxu0 0.0
  %145 = vmatpush1.msra.mxu0 0.0
  %146 = vmatprep.subr.mxu0 0.0
  %147 = vmatpush1.msra.mxu0 0.0
  %148 = vmatprep.subr.mxu0 0.0
  %149 = vmatpush1.msra.mxu0 0.0
  %150 = vmatprep.subr.mxu0 0.0
  %151 = vmatpush1.msra.mxu0 0.0
  %152 = vmatprep.subr.mxu0 0.0
  %153 = vmatpush1.msra.mxu0 0.0
  %154 = vmatprep.subr.mxu0 0.0
  %155 = vmatpush1.msra.mxu0 0.0
  %156 = vmatprep.subr.mxu0 0.0
  %157 = vmatpush1.msra.mxu0 0.0
  %158 = vmatprep.subr.mxu0 0.0
  %159 = vmatpush1.msra.mxu0 0.0
  %160 = vmatprep.subr.mxu0 0.0
  %161 = vmatpush1.msra.mxu0 0.0
  %162 = vmatprep.subr.mxu0 0.0
  %163 = vmatpush1.msra.mxu0 0.0
  %164 = vmatprep.subr.mxu0 0.0
  %165 = vmatpush1.msra.mxu0 0.0
  %166 = vmatprep.subr.mxu0 0.0
  %167 = vmatpush1.msra.mxu0 0.0
  %168 = vmatprep.subr.mxu0 0.0
  %169 = vmatpush1.msra.mxu0 0.0
  %170 = vmatprep.subr.mxu0 0.0
  %171 = vmatpush1.msra.mxu0 0.0
  %172 = vmatprep.subr.mxu0 0.0
  %173 = vmatpush1.msra.mxu0 0.0
  %174 = vmatprep.subr.mxu0 0.0
  %175 = vmatpush1.msra.mxu0 0.0
  %176 = vmatprep.subr.mxu0 0.0
  %177 = vmatpush1.msra.mxu0 0.0
  %178 = vmatprep.subr.mxu0 0.0
  %179 = vmatpush1.msra.mxu0 0.0
  %180 = vmatprep.mubr.f32.mxu0 0.0
  %181 = vmatmul.mubr.f32.gmra.mrb[0].mxu0 %v114
  %v182 = vpop.f32.mrb[0].mxu0
  %v183 = vadd.f32 %v109, %v182
  %v184 = vpop.f32.mrb[0].mxu0
  %185 = vdwg.mxu0
  %v186 = vlaneseq
  %v187 = vshrl.u32 %v186, 7
  %v188 = vsub.s32 0, %v187
  %v189 = vrot.slane %v28, %v188
  %v190 = vadd.f32 %v183, %v189
  %v191 = vmax.f32 %v190, 0.0
  %v192 = vlaneseq
  %v193 = vshrl.u32 %v192, 7
  %v194 = vsub.s32 0, %v193
  %v195 = vrot.slane %v29, %v194
  %vm196 = vcmask 261120
  %v198 = vsel %vm196, %v191, 0
  %200 = vmatprep.subr.mxu0 0.0
  %201 = vmatpush1.msra.mxu0 %v20
  %202 = vmatprep.subr.mxu0 0.0
  %203 = vmatpush1.msra.mxu0 %v21
  %204 = vmatprep.subr.mxu0 0.0
  %205 = vmatpush1.msra.mxu0 %v22
  %206 = vmatprep.subr.mxu0 0.0
  %207 = vmatpush1.msra.mxu0 %v23
  %208 = vmatprep.subr.mxu0 0.0
  %209 = vmatpush1.msra.mxu0 0.0
  %210 = vmatprep.subr.mxu0 0.0
  %211 = vmatpush1.msra.mxu0 0.0
  %212 = vmatprep.subr.mxu0 0.0
  %213 = vmatpush1.msra.mxu0 0.0
  %214 = vmatprep.subr.mxu0 0.0
  %215 = vmatpush1.msra.mxu0 0.0
  %216 = vmatprep.subr.mxu0 0.0
  %217 = vmatpush1.msra.mxu0 0.0
  %218 = vmatprep.subr.mxu0 0.0
  %219 = vmatpush1.msra.mxu0 0.0
  %220 = vmatprep.subr.mxu0 0.0
  %221 = vmatpush1.msra.mxu0 0.0
  %222 = vmatprep.subr.mxu0 0.0
  %223 = vmatpush1.msra.mxu0 0.0
  %224 = vmatprep.subr.mxu0 0.0
  %225 = vmatpush1.msra.mxu0 0.0
  %226 = vmatprep.subr.mxu0 0.0
  %227 = vmatpush1.msra.mxu0 0.0
  %228 = vmatprep.subr.mxu0 0.0
  %229 = vmatpush1.msra.mxu0 0.0
  %230 = vmatprep.subr.mxu0 0.0
  %231 = vmatpush1.msra.mxu0 0.0
  %232 = vmatprep.subr.mxu0 0.0
  %233 = vmatpush1.msra.mxu0 0.0
  %234 = vmatprep.subr.mxu0 0.0
  %235 = vmatpush1.msra.mxu0 0.0
  %236 = vmatprep.subr.mxu0 0.0
  %237 = vmatpush1.msra.mxu0 0.0
  %238 = vmatprep.subr.mxu0 0.0
  %239 = vmatpush1.msra.mxu0 0.0
  %240 = vmatprep.subr.mxu0 0.0
  %241 = vmatpush1.msra.mxu0 0.0
  %242 = vmatprep.subr.mxu0 0.0
  %243 = vmatpush1.msra.mxu0 0.0
  %244 = vmatprep.subr.mxu0 0.0
  %245 = vmatpush1.msra.mxu0 0.0
  %246 = vmatprep.subr.mxu0 0.0
  %247 = vmatpush1.msra.mxu0 0.0
  %248 = vmatprep.subr.mxu0 0.0
  %249 = vmatpush1.msra.mxu0 0.0
  %250 = vmatprep.subr.mxu0 0.0
  %251 = vmatpush1.msra.mxu0 0.0
  %252 = vmatprep.subr.mxu0 0.0
  %253 = vmatpush1.msra.mxu0 0.0
  %254 = vmatprep.subr.mxu0 0.0
  %255 = vmatpush1.msra.mxu0 0.0
  %256 = vmatprep.subr.mxu0 0.0
  %257 = vmatpush1.msra.mxu0 0.0
  %258 = vmatprep.subr.mxu0 0.0
  %259 = vmatpush1.msra.mxu0 0.0
  %260 = vmatprep.subr.mxu0 0.0
  %261 = vmatpush1.msra.mxu0 0.0
  %262 = vmatprep.subr.mxu0 0.0
  %263 = vmatpush1.msra.mxu0 0.0
  %264 = vmatprep.mubr.f32.mxu0 0.0
  %265 = vmatmul.mubr.f32.gmra.mrb[0].mxu0 %v198
  %v266 = vpop.f32.mrb[0].mxu0
  %v267 = vadd.f32 %v195, %v266
  %v268 = vpop.f32.mrb[0].mxu0
  %269 = vdwg.mxu0
  %v270 = vmax.f32 %v267, 0.0
  %v271 = vlaneseq
  %v272 = vshrl.u32 %v271, 7
  %v273 = vsub.s32 0, %v272
  %v274 = vrot.slane %v30, %v273
  %v276 = vsel %vm196, %v270, 0
  %278 = vmatprep.subr.mxu0 0.0
  %279 = vmatpush1.msra.mxu0 %v24
  %280 = vmatprep.subr.mxu0 0.0
  %281 = vmatpush1.msra.mxu0 %v25
  %282 = vmatprep.subr.mxu0 0.0
  %283 = vmatpush1.msra.mxu0 %v26
  %284 = vmatprep.subr.mxu0 0.0
  %285 = vmatpush1.msra.mxu0 %v27
  %286 = vmatprep.subr.mxu0 0.0
  %287 = vmatpush1.msra.mxu0 0.0
  %288 = vmatprep.subr.mxu0 0.0
  %289 = vmatpush1.msra.mxu0 0.0
  %290 = vmatprep.subr.mxu0 0.0
  %291 = vmatpush1.msra.mxu0 0.0
  %292 = vmatprep.subr.mxu0 0.0
  %293 = vmatpush1.msra.mxu0 0.0
  %294 = vmatprep.subr.mxu0 0.0
  %295 = vmatpush1.msra.mxu0 0.0
  %296 = vmatprep.subr.mxu0 0.0
  %297 = vmatpush1.msra.mxu0 0.0
  %298 = vmatprep.subr.mxu0 0.0
  %299 = vmatpush1.msra.mxu0 0.0
  %300 = vmatprep.subr.mxu0 0.0
  %301 = vmatpush1.msra.mxu0 0.0
  %302 = vmatprep.subr.mxu0 0.0
  %303 = vmatpush1.msra.mxu0 0.0
  %304 = vmatprep.subr.mxu0 0.0
  %305 = vmatpush1.msra.mxu0 0.0
  %306 = vmatprep.subr.mxu0 0.0
  %307 = vmatpush1.msra.mxu0 0.0
  %308 = vmatprep.subr.mxu0 0.0
  %309 = vmatpush1.msra.mxu0 0.0
  %310 = vmatprep.subr.mxu0 0.0
  %311 = vmatpush1.msra.mxu0 0.0
  %312 = vmatprep.subr.mxu0 0.0
  %313 = vmatpush1.msra.mxu0 0.0
  %314 = vmatprep.subr.mxu0 0.0
  %315 = vmatpush1.msra.mxu0 0.0
  %316 = vmatprep.subr.mxu0 0.0
  %317 = vmatpush1.msra.mxu0 0.0
  %318 = vmatprep.subr.mxu0 0.0
  %319 = vmatpush1.msra.mxu0 0.0
  %320 = vmatprep.subr.mxu0 0.0
  %321 = vmatpush1.msra.mxu0 0.0
  %322 = vmatprep.subr.mxu0 0.0
  %323 = vmatpush1.msra.mxu0 0.0
  %324 = vmatprep.subr.mxu0 0.0
  %325 = vmatpush1.msra.mxu0 0.0
  %326 = vmatprep.subr.mxu0 0.0
  %327 = vmatpush1.msra.mxu0 0.0
  %328 = vmatprep.subr.mxu0 0.0
  %329 = vmatpush1.msra.mxu0 0.0
  %330 = vmatprep.subr.mxu0 0.0
  %331 = vmatpush1.msra.mxu0 0.0
  %332 = vmatprep.subr.mxu0 0.0
  %333 = vmatpush1.msra.mxu0 0.0
  %334 = vmatprep.subr.mxu0 0.0
  %335 = vmatpush1.msra.mxu0 0.0
  %336 = vmatprep.subr.mxu0 0.0
  %337 = vmatpush1.msra.mxu0 0.0
  %338 = vmatprep.subr.mxu0 0.0
  %339 = vmatpush1.msra.mxu0 0.0
  %340 = vmatprep.subr.mxu0 0.0
  %341 = vmatpush1.msra.mxu0 0.0
  %342 = vmatprep.mubr.f32.mxu0 0.0
  %343 = vmatmul.mubr.f32.gmra.mrb[0].mxu0 %v276
  %v344 = vpop.f32.mrb[0].mxu0
  %v345 = vadd.f32 %v274, %v344
  %v346 = vpop.f32.mrb[0].mxu0
  %347 = vdwg.mxu0
  %v348 = vmax.f32 %v345, 0.0
  %v349 = vlaneseq
  %v350 = vshrl.u32 %v349, 7
  %v351 = vsub.s32 0, %v350
  %v352 = vrot.slane %v35, %v351
  %v354 = vsel %vm196, %v348, 0
  %356 = vmatprep.subr.mxu0 0.0
  %357 = vmatpush1.msra.mxu0 %v31
  %358 = vmatprep.subr.mxu0 0.0
  %359 = vmatpush1.msra.mxu0 %v32
  %360 = vmatprep.subr.mxu0 0.0
  %361 = vmatpush1.msra.mxu0 %v33
  %362 = vmatprep.subr.mxu0 0.0
  %363 = vmatpush1.msra.mxu0 %v34
  %364 = vmatprep.subr.mxu0 0.0
  %365 = vmatpush1.msra.mxu0 0.0
  %366 = vmatprep.subr.mxu0 0.0
  %367 = vmatpush1.msra.mxu0 0.0
  %368 = vmatprep.subr.mxu0 0.0
  %369 = vmatpush1.msra.mxu0 0.0
  %370 = vmatprep.subr.mxu0 0.0
  %371 = vmatpush1.msra.mxu0 0.0
  %372 = vmatprep.subr.mxu0 0.0
  %373 = vmatpush1.msra.mxu0 0.0
  %374 = vmatprep.subr.mxu0 0.0
  %375 = vmatpush1.msra.mxu0 0.0
  %376 = vmatprep.subr.mxu0 0.0
  %377 = vmatpush1.msra.mxu0 0.0
  %378 = vmatprep.subr.mxu0 0.0
  %379 = vmatpush1.msra.mxu0 0.0
  %380 = vmatprep.subr.mxu0 0.0
  %381 = vmatpush1.msra.mxu0 0.0
  %382 = vmatprep.subr.mxu0 0.0
  %383 = vmatpush1.msra.mxu0 0.0
  %384 = vmatprep.subr.mxu0 0.0
  %385 = vmatpush1.msra.mxu0 0.0
  %386 = vmatprep.subr.mxu0 0.0
  %387 = vmatpush1.msra.mxu0 0.0
  %388 = vmatprep.subr.mxu0 0.0
  %389 = vmatpush1.msra.mxu0 0.0
  %390 = vmatprep.subr.mxu0 0.0
  %391 = vmatpush1.msra.mxu0 0.0
  %392 = vmatprep.subr.mxu0 0.0
  %393 = vmatpush1.msra.mxu0 0.0
  %394 = vmatprep.subr.mxu0 0.0
  %395 = vmatpush1.msra.mxu0 0.0
  %396 = vmatprep.subr.mxu0 0.0
  %397 = vmatpush1.msra.mxu0 0.0
  %398 = vmatprep.subr.mxu0 0.0
  %399 = vmatpush1.msra.mxu0 0.0
  %400 = vmatprep.subr.mxu0 0.0
  %401 = vmatpush1.msra.mxu0 0.0
  %402 = vmatprep.subr.mxu0 0.0
  %403 = vmatpush1.msra.mxu0 0.0
  %404 = vmatprep.subr.mxu0 0.0
  %405 = vmatpush1.msra.mxu0 0.0
  %406 = vmatprep.subr.mxu0 0.0
  %407 = vmatpush1.msra.mxu0 0.0
  %408 = vmatprep.subr.mxu0 0.0
  %409 = vmatpush1.msra.mxu0 0.0
  %410 = vmatprep.subr.mxu0 0.0
  %411 = vmatpush1.msra.mxu0 0.0
  %412 = vmatprep.subr.mxu0 0.0
  %413 = vmatpush1.msra.mxu0 0.0
  %414 = vmatprep.subr.mxu0 0.0
  %415 = vmatpush1.msra.mxu0 0.0
  %416 = vmatprep.subr.mxu0 0.0
  %417 = vmatpush1.msra.mxu0 0.0
  %418 = vmatprep.subr.mxu0 0.0
  %419 = vmatpush1.msra.mxu0 0.0
  %420 = vmatprep.mubr.f32.mxu0 0.0
  %421 = vmatmul.mubr.f32.gmra.mrb[0].mxu0 %v354
  %v422 = vpop.f32.mrb[0].mxu0
  %v423 = vadd.f32 %v352, %v422
  %v424 = vpop.f32.mrb[0].mxu0
  %425 = vdwg.mxu0
  %426 = vst [vmem:[%s4] sm:$0xff] %v423
  // Predicated region
  $region18: #{actor_forward.1} parent=0 // pred_check
    _
  $region19: #{actor_forward.1} parent=0 // pred_check_branch
    %428 = sbr.rel (0) target = $region21
  $region20: #{actor_forward.1} parent=0 // pred_region
    _
  $region21: #{actor_forward.1} parent=0 // pred_fallthru
    _
  // Predicated region
  $region22: #{actor_forward.1} parent=0 // pred_check
    _
  $region23: #{actor_forward.1} parent=0 // pred_check_branch
    %430 = sbr.rel (0) target = $region25
  $region24: #{actor_forward.1} parent=0 // pred_region
    _
  $region25: #{actor_forward.1} parent=0 // pred_fallthru
    _

</llo_original>
